<compile_context>
chip_gen: v6e
topology: v6e:2x2x1
jax: 0.10.0
libtpu: 0.0.40
codegen_flags: <defaults>
</compile_context>

<pallas_src>
import functools

import jax
import jax.numpy as jnp
from jax.experimental import pallas as pl
from jax.experimental.pallas import tpu as pltpu


def _hier_loss_kernel(p_ref, lab_ref, out_ref, *, n_valid, l_total, tb_lanes):
    """One batch tile.

    p_ref   : [5, 8, tb_lanes]  logits (rows 0:2 -> h1, rows 2:5 -> h2)
    lab_ref : [8, tb_lanes]     int32 labels in {0,1,2} (0 in padded tail)
    out_ref : [1, 8, 128]       f32 per-block partials: sublane k holds
                                {Σ w1·nll1, Σ w1, Σ w2·nll2, Σ w2, 0, 0, 0, 0}[k]
    """
    i = pl.program_id(0)

    labels = lab_ref[...]                                            # [8, tb] i32

    # Validity mask for the padded batch tail.  Batch index b maps to
    # (sublane s, global lane gl) as b = s * l_total + gl.
    sub = jax.lax.broadcasted_iota(jnp.int32, (8, tb_lanes), 0)
    lane = jax.lax.broadcasted_iota(jnp.int32, (8, tb_lanes), 1)
    b_idx = sub * l_total + (i * tb_lanes + lane)
    mask = (b_idx < n_valid).astype(jnp.float32)                     # [8, tb]

    x0 = p_ref[0].astype(jnp.float32)
    x1 = p_ref[1].astype(jnp.float32)
    z0 = p_ref[2].astype(jnp.float32)
    z1 = p_ref[3].astype(jnp.float32)
    z2 = p_ref[4].astype(jnp.float32)

    # ---- Hierarchy 1: C=2, weights (0.1, 1.0); label2 = 0 if y < 2 else 1.
    lt2 = labels < 2
    m1 = jnp.maximum(x0, x1)
    lse1 = m1 + jnp.log(1.0 + jnp.exp(-jnp.abs(x0 - x1)))            # 1 exp, 1 log
    logit1 = jnp.where(lt2, x0, x1)
    w1 = jnp.where(lt2, 0.1, 1.0) * mask
    nll1 = lse1 - logit1

    # ---- Hierarchy 2: C=3, weights (0.1, 1.0, 1.0).
    eq0 = labels == 0
    eq1 = labels == 1
    m2 = jnp.maximum(jnp.maximum(z0, z1), z2)
    # exp(z_max - m2) == 1 exactly, so only the two non-max terms need an exp.
    is0 = jnp.logical_and(z0 >= z1, z0 >= z2)        # argmax == 0 (ties -> 0)
    is1 = jnp.logical_and(~is0, z1 >= z2)            # argmax == 1
    is2 = jnp.logical_and(~is0, ~is1)                # argmax == 2
    u = jnp.where(is0, z1, z0)                       # first non-max value
    v = jnp.where(is2, z1, z2)                       # second non-max value
    lse2 = m2 + jnp.log(1.0 + jnp.exp(u - m2) + jnp.exp(v - m2))     # 2 exp, 1 log
    logit2 = jnp.where(eq0, z0, jnp.where(eq1, z1, z2))
    w2 = jnp.where(eq0, 0.1, 1.0) * mask
    nll2 = lse2 - logit2

    # Per-block partial sums (whole-vreg VPU work, one XLU reduce each).
    s0 = jnp.sum(w1 * nll1)
    s1 = jnp.sum(w1)
    s2 = jnp.sum(w2 * nll2)
    s3 = jnp.sum(w2)

    row = jax.lax.broadcasted_iota(jnp.int32, (1, 8, 128), 1)
    out_ref[...] = jnp.where(row == 0, s0,
                   jnp.where(row == 1, s1,
                   jnp.where(row == 2, s2,
                   jnp.where(row == 3, s3, 0.0))))


@functools.partial(jax.jit, static_argnames=("block_batch",))
def hierarchical_class_loss(probas1, probas2, labels, *, block_batch=262144):
    """probas1: [B, 2], probas2: [B, 3] (f32/bf16); labels: [B] int in {0,1,2}."""
    B = labels.shape[0]

    # Tile geometry: each grid step covers 8 sublanes x tb_lanes lanes of batch.
    block_batch = max(1024, (block_batch // 1024) * 1024)
    if B <= block_batch:
        b_pad = -(-B // 1024) * 1024
        n_blocks = 1
    else:
        n_blocks = -(-B // block_batch)
        b_pad = n_blocks * block_batch
    l_total = b_pad // 8
    tb_lanes = l_total // n_blocks

    # Single fused relayout pass: concat -> pad -> transpose -> sublane fold.
    p = jnp.concatenate([probas1, probas2], axis=1)                  # [B, 5]
    p = jnp.pad(p, ((0, b_pad - B), (0, 0)))                         # [b_pad, 5]
    p = p.T.reshape(5, 8, l_total)                                   # [5, 8, L]
    lab = jnp.pad(labels.astype(jnp.int32), (0, b_pad - B)).reshape(8, l_total)

    kernel = functools.partial(_hier_loss_kernel, n_valid=B,
                               l_total=l_total, tb_lanes=tb_lanes)

    out = pl.pallas_call(
        kernel,
        out_shape=jax.ShapeDtypeStruct((n_blocks, 8, 128), jnp.float32),
        grid=(n_blocks,),
        in_specs=[
            pl.BlockSpec((5, 8, tb_lanes), lambda i: (0, 0, i)),     # combined logits
            pl.BlockSpec((8, tb_lanes), lambda i: (0, i)),           # labels
        ],
        out_specs=pl.BlockSpec((1, 8, 128), lambda i: (i, 0, 0)),
        compiler_params=pltpu.CompilerParams(
            dimension_semantics=("parallel",),
            vmem_limit_bytes=32 * 1024 * 1024),
    )(p, lab)

    # Exact weighted means from per-block weighted SUMS (order-independent).
    totals = jnp.sum(out[:, :4, 0], axis=0)                          # (4,)
    return totals[0] / totals[1] + totals[2] / totals[3]


def _reference_loss(probas1, probas2, labels):
    """Pure-JAX reference mirroring torch.nn.CrossEntropyLoss(weight=...)."""
    def wce(logits, labels, w):
        logp = jax.nn.log_softmax(logits.astype(jnp.float32), axis=-1)
        nll = -jnp.take_along_axis(logp, labels[:, None], axis=-1)[:, 0]
        wy = w[labels]
        return jnp.sum(wy * nll) / jnp.sum(wy)

    labels2 = jnp.where(labels < 2, 0, 1)
    h1 = wce(probas1, labels2, jnp.array([0.1, 1.0], jnp.float32))
    h2 = wce(probas2, labels, jnp.array([0.1, 1.0, 1.0], jnp.float32))
    return h1 + h2


if __name__ == "__main__":
    key = jax.random.PRNGKey(0)
    k1, k2, k3, k4, k5, k6 = jax.random.split(key, 6)

    # Small shapes consistent with the module's forward: probas ([B,2],[B,3]), labels [B].
    B = 8
    probas1 = jax.random.normal(k1, (B, 2), dtype=jnp.float32)
    probas2 = jax.random.normal(k2, (B, 3), dtype=jnp.float32)
    labels = jax.random.randint(k3, (B,), 0, 3, dtype=jnp.int32)

    loss = jax.block_until_ready(hierarchical_class_loss(probas1, probas2, labels))
    ref = _reference_loss(probas1, probas2, labels)
    assert jnp.allclose(loss, ref, rtol=1e-5, atol=1e-5), (loss, ref)

    # Also exercise the multi-block "parallel" partial-sum path + tail mask.
    B2 = 3000
    p1b = jax.random.normal(k4, (B2, 2), dtype=jnp.float32)
    p2b = jax.random.normal(k5, (B2, 3), dtype=jnp.float32)
    lb = jax.random.randint(k6, (B2,), 0, 3, dtype=jnp.int32)
    loss2 = jax.block_until_ready(
        hierarchical_class_loss(p1b, p2b, lb, block_batch=1024))
    ref2 = _reference_loss(p1b, p2b, lb)
    assert jnp.allclose(loss2, ref2, rtol=1e-5, atol=1e-5), (loss2, ref2)

    print("KERNEL_OK")
</pallas_src>

<mosaic_0001>
module attributes {stable_mosaic.version = 11 : i64} {
  func.func @_hier_loss_kernel(%arg0: i32, %arg1: memref<5x8x128xf32, #tpu.memory_space<vmem>>, %arg2: memref<8x128xi32, #tpu.memory_space<vmem>>, %arg3: memref<1x8x128xf32, #tpu.memory_space<vmem>>) attributes {dimension_semantics = [#tpu.dimension_semantics<parallel>], iteration_bounds = array<i64: 1>, scalar_prefetch = 0 : i64, scratch_operands = 0 : i64, tpu.core_type = #tpu.core_type<tc>, window_params = [{transform_indices = @transform_0, window_bounds = array<i64: 5, 8, 128>}, {transform_indices = @transform_1, window_bounds = array<i64: 8, 128>}, {transform_indices = @transform_2, window_bounds = array<i64: 1, 8, 128>}]} {
    %c0 = arith.constant 0 : index
    %c0_0 = arith.constant 0 : index
    %0 = vector.load %arg2[%c0, %c0_0] : memref<8x128xi32, #tpu.memory_space<vmem>>, vector<8x128xi32>
    %1 = tpu.iota {dimensions = array<i32: 0>} : vector<8x128xi32>
    %2 = tpu.iota {dimensions = array<i32: 1>} : vector<8x128xi32>
    %c128_i32 = arith.constant 128 : i32
    %3 = vector.broadcast %c128_i32 : i32 to vector<8x128xi32>
    %4 = arith.muli %1, %3 : vector<8x128xi32>
    %c128_i32_1 = arith.constant 128 : i32
    %5 = arith.muli %arg0, %c128_i32_1 : i32
    %6 = vector.broadcast %5 : i32 to vector<8x128xi32>
    %7 = arith.addi %6, %2 : vector<8x128xi32>
    %8 = arith.addi %4, %7 : vector<8x128xi32>
    %c8_i32 = arith.constant 8 : i32
    %9 = vector.broadcast %c8_i32 : i32 to vector<8x128xi32>
    %10 = arith.cmpi slt, %8, %9 : vector<8x128xi32>
    %11 = arith.extui %10 : vector<8x128xi1> to vector<8x128xi32>
    %12 = arith.sitofp %11 : vector<8x128xi32> to vector<8x128xf32>
    %c0_2 = arith.constant 0 : index
    %c0_3 = arith.constant 0 : index
    %c0_4 = arith.constant 0 : index
    %13 = vector.load %arg1[%c0_2, %c0_3, %c0_4] : memref<5x8x128xf32, #tpu.memory_space<vmem>>, vector<1x8x128xf32>
    %14 = vector.shape_cast %13 : vector<1x8x128xf32> to vector<8x128xf32>
    %c1 = arith.constant 1 : index
    %c0_5 = arith.constant 0 : index
    %c0_6 = arith.constant 0 : index
    %15 = vector.load %arg1[%c1, %c0_5, %c0_6] : memref<5x8x128xf32, #tpu.memory_space<vmem>>, vector<1x8x128xf32>
    %16 = vector.shape_cast %15 : vector<1x8x128xf32> to vector<8x128xf32>
    %c2 = arith.constant 2 : index
    %c0_7 = arith.constant 0 : index
    %c0_8 = arith.constant 0 : index
    %17 = vector.load %arg1[%c2, %c0_7, %c0_8] : memref<5x8x128xf32, #tpu.memory_space<vmem>>, vector<1x8x128xf32>
    %18 = vector.shape_cast %17 : vector<1x8x128xf32> to vector<8x128xf32>
    %c3 = arith.constant 3 : index
    %c0_9 = arith.constant 0 : index
    %c0_10 = arith.constant 0 : index
    %19 = vector.load %arg1[%c3, %c0_9, %c0_10] : memref<5x8x128xf32, #tpu.memory_space<vmem>>, vector<1x8x128xf32>
    %20 = vector.shape_cast %19 : vector<1x8x128xf32> to vector<8x128xf32>
    %c4 = arith.constant 4 : index
    %c0_11 = arith.constant 0 : index
    %c0_12 = arith.constant 0 : index
    %21 = vector.load %arg1[%c4, %c0_11, %c0_12] : memref<5x8x128xf32, #tpu.memory_space<vmem>>, vector<1x8x128xf32>
    %22 = vector.shape_cast %21 : vector<1x8x128xf32> to vector<8x128xf32>
    %c2_i32 = arith.constant 2 : i32
    %23 = vector.broadcast %c2_i32 : i32 to vector<8x128xi32>
    %24 = arith.cmpi slt, %0, %23 : vector<8x128xi32>
    %25 = arith.maximumf %14, %16 : vector<8x128xf32>
    %26 = arith.subf %14, %16 : vector<8x128xf32>
    %27 = math.absf %26 : vector<8x128xf32>
    %cst = arith.constant 0.000000e+00 : f32
    %28 = vector.broadcast %cst : f32 to vector<8x128xf32>
    %29 = arith.subf %28, %27 : vector<8x128xf32>
    %30 = math.exp %29 : vector<8x128xf32>
    %cst_13 = arith.constant 1.000000e+00 : f32
    %31 = vector.broadcast %cst_13 : f32 to vector<8x128xf32>
    %32 = arith.addf %31, %30 : vector<8x128xf32>
    %33 = math.log %32 : vector<8x128xf32>
    %34 = arith.addf %25, %33 : vector<8x128xf32>
    %35 = arith.select %24, %14, %16 : vector<8x128xi1>, vector<8x128xf32>
    %cst_14 = arith.constant 1.000000e-01 : f32
    %cst_15 = arith.constant 1.000000e+00 : f32
    %36 = vector.broadcast %cst_14 : f32 to vector<8x128xf32>
    %37 = vector.broadcast %cst_15 : f32 to vector<8x128xf32>
    %38 = arith.select %24, %36, %37 : vector<8x128xi1>, vector<8x128xf32>
    %39 = arith.mulf %38, %12 : vector<8x128xf32>
    %40 = arith.subf %34, %35 : vector<8x128xf32>
    %c0_i32 = arith.constant 0 : i32
    %41 = vector.broadcast %c0_i32 : i32 to vector<8x128xi32>
    %42 = arith.cmpi eq, %0, %41 : vector<8x128xi32>
    %c1_i32 = arith.constant 1 : i32
    %43 = vector.broadcast %c1_i32 : i32 to vector<8x128xi32>
    %44 = arith.cmpi eq, %0, %43 : vector<8x128xi32>
    %45 = arith.maximumf %18, %20 : vector<8x128xf32>
    %46 = arith.maximumf %45, %22 : vector<8x128xf32>
    %47 = arith.cmpf oge, %18, %20 : vector<8x128xf32>
    %48 = arith.cmpf oge, %18, %22 : vector<8x128xf32>
    %49 = arith.andi %47, %48 : vector<8x128xi1>
    %cst_16 = arith.constant dense<true> : vector<8x128xi1>
    %50 = arith.xori %49, %cst_16 : vector<8x128xi1>
    %51 = arith.cmpf oge, %20, %22 : vector<8x128xf32>
    %52 = arith.andi %50, %51 : vector<8x128xi1>
    %cst_17 = arith.constant dense<true> : vector<8x128xi1>
    %53 = arith.xori %49, %cst_17 : vector<8x128xi1>
    %cst_18 = arith.constant dense<true> : vector<8x128xi1>
    %54 = arith.xori %52, %cst_18 : vector<8x128xi1>
    %55 = arith.andi %53, %54 : vector<8x128xi1>
    %56 = arith.select %49, %20, %18 : vector<8x128xi1>, vector<8x128xf32>
    %57 = arith.select %55, %20, %22 : vector<8x128xi1>, vector<8x128xf32>
    %58 = arith.subf %56, %46 : vector<8x128xf32>
    %59 = math.exp %58 : vector<8x128xf32>
    %cst_19 = arith.constant 1.000000e+00 : f32
    %60 = vector.broadcast %cst_19 : f32 to vector<8x128xf32>
    %61 = arith.addf %60, %59 : vector<8x128xf32>
    %62 = arith.subf %57, %46 : vector<8x128xf32>
    %63 = math.exp %62 : vector<8x128xf32>
    %64 = arith.addf %61, %63 : vector<8x128xf32>
    %65 = math.log %64 : vector<8x128xf32>
    %66 = arith.addf %46, %65 : vector<8x128xf32>
    %67 = arith.select %44, %20, %22 : vector<8x128xi1>, vector<8x128xf32>
    %68 = arith.select %42, %18, %67 : vector<8x128xi1>, vector<8x128xf32>
    %cst_20 = arith.constant 1.000000e-01 : f32
    %cst_21 = arith.constant 1.000000e+00 : f32
    %69 = vector.broadcast %cst_20 : f32 to vector<8x128xf32>
    %70 = vector.broadcast %cst_21 : f32 to vector<8x128xf32>
    %71 = arith.select %42, %69, %70 : vector<8x128xi1>, vector<8x128xf32>
    %72 = arith.mulf %71, %12 : vector<8x128xf32>
    %73 = arith.subf %66, %68 : vector<8x128xf32>
    %74 = arith.mulf %39, %40 : vector<8x128xf32>
    %75 = vector.shape_cast %74 : vector<8x128xf32> to vector<1x8x128xf32>
    %cst_22 = arith.constant dense<0.000000e+00> : vector<1xf32>
    %76 = vector.multi_reduction <add>, %75, %cst_22 [1, 2] : vector<1x8x128xf32> to vector<1xf32>
    %77 = vector.shape_cast %76 : vector<1xf32> to vector<1x1x1xf32>
    %78 = vector.extract %77[0, 0, 0] : f32 from vector<1x1x1xf32>
    %79 = vector.shape_cast %39 : vector<8x128xf32> to vector<1x8x128xf32>
    %cst_23 = arith.constant dense<0.000000e+00> : vector<1xf32>
    %80 = vector.multi_reduction <add>, %79, %cst_23 [1, 2] : vector<1x8x128xf32> to vector<1xf32>
    %81 = vector.shape_cast %80 : vector<1xf32> to vector<1x1x1xf32>
    %82 = vector.extract %81[0, 0, 0] : f32 from vector<1x1x1xf32>
    %83 = arith.mulf %72, %73 : vector<8x128xf32>
    %84 = vector.shape_cast %83 : vector<8x128xf32> to vector<1x8x128xf32>
    %cst_24 = arith.constant dense<0.000000e+00> : vector<1xf32>
    %85 = vector.multi_reduction <add>, %84, %cst_24 [1, 2] : vector<1x8x128xf32> to vector<1xf32>
    %86 = vector.shape_cast %85 : vector<1xf32> to vector<1x1x1xf32>
    %87 = vector.extract %86[0, 0, 0] : f32 from vector<1x1x1xf32>
    %88 = vector.shape_cast %72 : vector<8x128xf32> to vector<1x8x128xf32>
    %cst_25 = arith.constant dense<0.000000e+00> : vector<1xf32>
    %89 = vector.multi_reduction <add>, %88, %cst_25 [1, 2] : vector<1x8x128xf32> to vector<1xf32>
    %90 = vector.shape_cast %89 : vector<1xf32> to vector<1x1x1xf32>
    %91 = vector.extract %90[0, 0, 0] : f32 from vector<1x1x1xf32>
    %92 = tpu.iota {dimensions = array<i32: 1>} : vector<1x8x128xi32>
    %c0_i32_26 = arith.constant 0 : i32
    %93 = vector.broadcast %c0_i32_26 : i32 to vector<1x8x128xi32>
    %94 = arith.cmpi eq, %92, %93 : vector<1x8x128xi32>
    %c1_i32_27 = arith.constant 1 : i32
    %95 = vector.broadcast %c1_i32_27 : i32 to vector<1x8x128xi32>
    %96 = arith.cmpi eq, %92, %95 : vector<1x8x128xi32>
    %c2_i32_28 = arith.constant 2 : i32
    %97 = vector.broadcast %c2_i32_28 : i32 to vector<1x8x128xi32>
    %98 = arith.cmpi eq, %92, %97 : vector<1x8x128xi32>
    %c3_i32 = arith.constant 3 : i32
    %99 = vector.broadcast %c3_i32 : i32 to vector<1x8x128xi32>
    %100 = arith.cmpi eq, %92, %99 : vector<1x8x128xi32>
    %cst_29 = arith.constant 0.000000e+00 : f32
    %101 = vector.broadcast %91 : f32 to vector<1x8x128xf32>
    %102 = vector.broadcast %cst_29 : f32 to vector<1x8x128xf32>
    %103 = arith.select %100, %101, %102 : vector<1x8x128xi1>, vector<1x8x128xf32>
    %104 = vector.broadcast %87 : f32 to vector<1x8x128xf32>
    %105 = arith.select %98, %104, %103 : vector<1x8x128xi1>, vector<1x8x128xf32>
    %106 = vector.broadcast %82 : f32 to vector<1x8x128xf32>
    %107 = arith.select %96, %106, %105 : vector<1x8x128xi1>, vector<1x8x128xf32>
    %108 = vector.broadcast %78 : f32 to vector<1x8x128xf32>
    %109 = arith.select %94, %108, %107 : vector<1x8x128xi1>, vector<1x8x128xf32>
    %c0_30 = arith.constant 0 : index
    %c0_31 = arith.constant 0 : index
    %c0_32 = arith.constant 0 : index
    %110 = vector.load %arg3[%c0_30, %c0_31, %c0_32] : memref<1x8x128xf32, #tpu.memory_space<vmem>>, vector<1x8x128xf32>
    tpu.vector_store %arg3[%c0_30, %c0_31, %c0_32], %109 {strides = array<i32>} : memref<1x8x128xf32, #tpu.memory_space<vmem>>, vector<1x8x128xf32>,
    return
  }
  func.func @transform_0(%arg0: i32) -> (i32, i32, i32) {
    %c0_i32 = arith.constant 0 : i32
    %c0_i32_0 = arith.constant 0 : i32
    %c0_i32_1 = arith.constant 0 : i32
    return %c0_i32, %c0_i32_0, %arg0 : i32, i32, i32
  }
  func.func @transform_1(%arg0: i32) -> (i32, i32) {
    %c0_i32 = arith.constant 0 : i32
    %c0_i32_0 = arith.constant 0 : i32
    return %c0_i32, %arg0 : i32, i32
  }
  func.func @transform_2(%arg0: i32) -> (i32, i32, i32) {
    %c0_i32 = arith.constant 0 : i32
    %c0_i32_0 = arith.constant 0 : i32
    %c0_i32_1 = arith.constant 0 : i32
    return %arg0, %c0_i32, %c0_i32_0 : i32, i32, i32
  }
}

</mosaic_0001>

<llo_original>
// kernel: hierarchical_class_loss.1
$region0: #{hierarchical_class_loss.1}
  #allocation0 [shape = 'u32[]', space=smem, size = 0x4, offset = 0x4, fixed_abs, tag = 'smem constant byte address 0x4 - core index']
  #allocation1 [shape = 'u32[144,128]{1,0:T(1,128)}', space=vmem, size = 0x12000, scoped, tag = 'internal scratch']
  %s0 = inlined_call_operand.vmem [shape: f32[5,8,128], index: 0, kind: input, shape index: {}]
  %s1 = inlined_call_operand.vmem [shape: s32[8,128], index: 1, kind: input, shape index: {}]
  %s2 = inlined_call_operand.vmem [shape: f32[1,8,128], index: 2, kind: output, shape index: {}]
  %s3 = sld [smem:[#allocation0]]
  $region18: #{hierarchical_class_loss.1} parent=0
    _
  %s5 = ssub.s32 1, %s3
  %s6 = scalar_select 0, %s5, %s3
  // Predicated region
  $region2: #{hierarchical_class_loss.1} parent=0 // pred_check
    _
  $region3: #{hierarchical_class_loss.1} parent=0 // pred_check_branch
    %8 = sbr.rel (0) target = $region5
  $region4: #{hierarchical_class_loss.1} parent=0 // pred_region
    _
  $region5: #{hierarchical_class_loss.1} parent=0 // pred_fallthru
    _
  // Predicated region
  $region6: #{hierarchical_class_loss.1} parent=0 // pred_check
    _
  $region7: #{hierarchical_class_loss.1} parent=0 // pred_check_branch
    %10 = sbr.rel (0) target = $region9
  $region8: #{hierarchical_class_loss.1} parent=0 // pred_region
    _
  $region9: #{hierarchical_class_loss.1} parent=0 // pred_fallthru
    _
  %v11 = vld [vmem:[%s1] sm:$0xff]
  %v12 = vlaneseq
  %v13 = vshrl.u32 %v12, 7
  %v14 = vlaneseq
  %v15 = vand.u32 %v14, 127
  %v16 = vmul.u32 %v13, 128
  %s17 = smul.u32 0, 128
  %v18 = vstv %s17
  %v19 = vadd.s32 %v18, %v15
  %v20 = vadd.s32 %v16, %v19
  %vm21 = vcmp.lt.s32.totalorder %v20, 8
  %v22 = vsel %vm21, 1, 0
  %v23 = vcvt.s32.f32 %v22
  %v24 = vld [vmem:[%s0] sm:$0xff]
  %s25 = scalar_lea.vmem %s0, 8
  %v26 = vld [vmem:[%s25] sm:$0xff]
  %s27 = scalar_lea.vmem %s0, 16
  %v28 = vld [vmem:[%s27] sm:$0xff]
  %s29 = scalar_lea.vmem %s0, 24
  %v30 = vld [vmem:[%s29] sm:$0xff]
  %s31 = scalar_lea.vmem %s0, 32
  %v32 = vld [vmem:[%s31] sm:$0xff]
  %vm33 = vcmp.lt.s32.totalorder %v11, 2
  %v34 = vmax.f32 %v24, %v26
  %v35 = vsub.f32 %v24, %v26
  %v36 = vand.u32 2147483647, %v35
  %v37 = vsub.f32 0.0, %v36
  %v38 = vmul.f32 %v37, 1.442695
  %v39 = vpow.pop %v38
  %v40 = vadd.f32 %v39, 1.0
  %v41 = vlog2.pop %v40
  %v42 = vmul.f32 %v41, 0.6931472
  %v43 = vadd.f32 %v34, %v42
  %v44 = vsel %vm33, %v24, %v26
  %v45 = vsel %vm33, 0.1, 1.0
  %v46 = vmul.f32 %v45, %v23
  %v47 = vsub.f32 %v43, %v44
  %vm48 = vcmp.eq.s32.totalorder %v11, 0
  %vm49 = vcmp.eq.s32.totalorder %v11, 1
  %v50 = vmax.f32 %v28, %v30
  %v51 = vmax.f32 %v50, %v32
  %vm52 = vcmp.ge.f32.partialorder %v28, %v30
  %vm53 = vcmp.ge.f32.partialorder %v28, %v32
  %vm54 = vmand %vm52, %vm53
  %vm55 = vmxor %vm54, 1
  %vm56 = vcmp.ge.f32.partialorder %v30, %v32
  %vm57 = vmand %vm55, %vm56
  %vm58 = vmxor %vm57, 1
  %vm59 = vmand %vm55, %vm58
  %v60 = vsel %vm54, %v30, %v28
  %v61 = vsel %vm59, %v30, %v32
  %v62 = vsub.f32 %v60, %v51
  %v63 = vmul.f32 %v62, 1.442695
  %v64 = vpow.pop %v63
  %v65 = vadd.f32 %v64, 1.0
  %v66 = vsub.f32 %v61, %v51
  %v67 = vmul.f32 %v66, 1.442695
  %v68 = vpow.pop %v67
  %v69 = vadd.f32 %v65, %v68
  %v70 = vlog2.pop %v69
  %v71 = vmul.f32 %v70, 0.6931472
  %v72 = vadd.f32 %v51, %v71
  %v73 = vsel %vm49, %v30, %v32
  %v74 = vsel %vm48, %v28, %v73
  %v75 = vsel %vm48, 0.1, 1.0
  %v76 = vmul.f32 %v75, %v23
  %v77 = vsub.f32 %v72, %v74
  %v78 = vmul.f32 %v46, %v47
  %79 = vadd.xlane.f32.xlu0 %v78
  %v80 = vpop.xlane.xlu0 %79
  %v81 = vrot.slane %v80, 4
  %v82 = vadd.f32 %v80, %v81
  %v83 = vrot.slane %v82, 2
  %v84 = vadd.f32 %v82, %v83
  %v85 = vrot.slane %v84, 1
  %v86 = vadd.f32 %v84, %v85
  %s87 = vtos %v86
  %88 = vadd.xlane.f32.xlu0 %v46
  %v89 = vpop.xlane.xlu0 %88
  %v90 = vrot.slane %v89, 4
  %v91 = vadd.f32 %v89, %v90
  %v92 = vrot.slane %v91, 2
  %v93 = vadd.f32 %v91, %v92
  %v94 = vrot.slane %v93, 1
  %v95 = vadd.f32 %v93, %v94
  %s96 = vtos %v95
  %v97 = vmul.f32 %v76, %v77
  %98 = vadd.xlane.f32.xlu0 %v97
  %v99 = vpop.xlane.xlu0 %98
  %v100 = vrot.slane %v99, 4
  %v101 = vadd.f32 %v99, %v100
  %v102 = vrot.slane %v101, 2
  %v103 = vadd.f32 %v101, %v102
  %v104 = vrot.slane %v103, 1
  %v105 = vadd.f32 %v103, %v104
  %s106 = vtos %v105
  %107 = vadd.xlane.f32.xlu0 %v76
  %v108 = vpop.xlane.xlu0 %107
  %v109 = vrot.slane %v108, 4
  %v110 = vadd.f32 %v108, %v109
  %v111 = vrot.slane %v110, 2
  %v112 = vadd.f32 %v110, %v111
  %v113 = vrot.slane %v112, 1
  %v114 = vadd.f32 %v112, %v113
  %s115 = vtos %v114
  %vm116 = vcmp.eq.s32.totalorder %v13, 0
  %vm117 = vcmp.eq.s32.totalorder %v13, 1
  %vm118 = vcmp.eq.s32.totalorder %v13, 2
  %vm119 = vcmp.eq.s32.totalorder %v13, 3
  %v120 = vstv %s115
  %v121 = vsel %vm119, %v120, 0.0
  %v122 = vstv %s106
  %v123 = vsel %vm118, %v122, %v121
  %v124 = vstv %s96
  %v125 = vsel %vm117, %v124, %v123
  %v126 = vstv %s87
  %v127 = vsel %vm116, %v126, %v125
  %128 = vst [vmem:[%s2] sm:$0xff] %v127
  // Predicated region
  $region10: #{hierarchical_class_loss.1} parent=0 // pred_check
    _
  $region11: #{hierarchical_class_loss.1} parent=0 // pred_check_branch
    %130 = sbr.rel (0) target = $region13
  $region12: #{hierarchical_class_loss.1} parent=0 // pred_region
    _
  $region13: #{hierarchical_class_loss.1} parent=0 // pred_fallthru
    _
  // Predicated region
  $region14: #{hierarchical_class_loss.1} parent=0 // pred_check
    _
  $region15: #{hierarchical_class_loss.1} parent=0 // pred_check_branch
    %132 = sbr.rel (0) target = $region17
  $region16: #{hierarchical_class_loss.1} parent=0 // pred_region
    _
  $region17: #{hierarchical_class_loss.1} parent=0 // pred_fallthru
    _

</llo_original>
